<compile_context>
chip_gen: v5e
topology: v5e:2x2
jax: 0.10.0
libtpu: 0.0.40
codegen_flags: <defaults>
</compile_context>

<pallas_src>
import jax
import jax.numpy as jnp
import numpy as np
from jax.experimental import pallas as pl
from jax.experimental.pallas import tpu as pltpu


def lstm_recurrence_kernel(ix_ref, whh_ref, len_ref, hh_ref):
    """Fused single-layer LSTM recurrence, fully unrolled in one kernel call.

    ix_ref : (T, Bp, 4H)  precomputed x_t @ W_ih_f + b, gate order (i, f, o, g)
    whh_ref: (H, 4H)      fused hidden->gate weights
    len_ref: (Bp, 1)      sequence lengths as float32
    hh_ref : (Bp, T*H)    per-step hidden states, lane-dense (zeros past length)
    """
    T, Bp, G = ix_ref.shape
    H = G // 4

    whh = whh_ref[...]          # (H, 4H), resident for the whole loop
    lens = len_ref[...]         # (Bp, 1)

    h = None
    c = None
    outs = []
    for t in range(T):          # static unroll: T is small and known at trace time
        pre = ix_ref[t]                                   # (Bp, 4H) whole tile
        if t > 0:
            pre = pre + jnp.dot(h, whh, preferred_element_type=jnp.float32)
        s = jax.nn.sigmoid(pre[:, :3 * H])                # gates i, f, o (contiguous)
        g = jnp.tanh(pre[:, 3 * H:])                      # gate g
        i_g = s[:, :H]
        f_g = s[:, H:2 * H]
        o_g = s[:, 2 * H:]
        c = i_g * g if t == 0 else f_g * c + i_g * g      # c0 == 0 folded away
        h = o_g * jnp.tanh(c)
        m = (lens > float(t)).astype(jnp.float32)         # (Bp, 1), off carry path
        outs.append(m * h)                                # exact 0 past the length
    hh_ref[...] = jnp.concatenate(outs, axis=-1)          # one dense 2-vreg store


def encoder_rnn_forward(x, x_len, emb_table, w_ih, w_hh, b):
    """x: [B, T] int32 token ids, x_len: [B] lengths (>= 1).

    w_ih: (4, E, H), w_hh: (4, H, H), b: (4, 1, H) in PyTorch gate order (i, f, g, o).
    Returns (hh [B, T, H], h_t [B, H]) in the ORIGINAL batch order."""
    B, T = x.shape
    E = emb_table.shape[1]
    H = w_hh.shape[-1]
    Bp = ((B + 7) // 8) * 8                                      # full sublanes

    # Fuse gates; reorder (i, f, g, o) -> (i, f, o, g) so sigmoid is contiguous.
    perm = (0, 1, 3, 2)
    w_ih_f = jnp.concatenate([w_ih[k] for k in perm], axis=-1)   # (E, 4H)
    w_hh_f = jnp.concatenate([w_hh[k] for k in perm], axis=-1)   # (H, 4H)
    b_f = jnp.concatenate([b[k] for k in perm], axis=-1)         # (1, 4H)

    # Embedding gather (XLA glue) + batch padding.
    emb = jnp.take(emb_table, x, axis=0)                         # (B, T, E)
    emb_p = jnp.zeros((Bp, T, E), jnp.float32).at[:B].set(emb)
    len_p = jnp.zeros((Bp, 1), jnp.float32).at[:B, 0].set(x_len.astype(jnp.float32))

    # Input projection hoisted off the serial path: one (T*Bp, E) x (E, 4H) matmul,
    # laid out (T, Bp, 4H) so the kernel's per-step read is a whole (8, 128) tile.
    ix = jnp.einsum('bte,eg->tbg', emb_p, w_ih_f,
                    precision=jax.lax.Precision.HIGHEST) + b_f   # (T, Bp, 4H)

    vmem = pl.BlockSpec(memory_space=pltpu.MemorySpace.VMEM)     # whole array in VMEM
    hh_flat = pl.pallas_call(
        lstm_recurrence_kernel,
        out_shape=jax.ShapeDtypeStruct((Bp, T * H), jnp.float32),
        in_specs=[vmem, vmem, vmem],
        out_specs=vmem,
    )(ix, w_hh_f, len_p)

    hh = hh_flat.reshape(Bp, T, H)[:B]                           # [B, T, H]
    # Final hidden state = output at the last valid step (pack_padded semantics).
    h_t = hh[jnp.arange(B), jnp.maximum(x_len.astype(jnp.int32) - 1, 0)]
    return hh, h_t


def _reference(emb, x_len, w_ih, w_hh, b):
    """Pure NumPy reference (per-sequence LSTM with zero padding past length)."""
    emb = np.asarray(emb, np.float32)
    w_ih = np.asarray(w_ih); w_hh = np.asarray(w_hh); b = np.asarray(b)
    B, T, E = emb.shape
    H = w_hh.shape[-1]
    h = np.zeros((B, H), np.float32)
    c = np.zeros((B, H), np.float32)
    hh = np.zeros((B, T, H), np.float32)
    sig = lambda z: 1.0 / (1.0 + np.exp(-z))
    for t in range(T):
        x_t = emb[:, t, :]
        i_g = sig(x_t @ w_ih[0] + h @ w_hh[0] + b[0])
        f_g = sig(x_t @ w_ih[1] + h @ w_hh[1] + b[1])
        g_g = np.tanh(x_t @ w_ih[2] + h @ w_hh[2] + b[2])
        o_g = sig(x_t @ w_ih[3] + h @ w_hh[3] + b[3])
        c_new = f_g * c + i_g * g_g
        h_new = o_g * np.tanh(c_new)
        valid = (np.asarray(x_len) > t)[:, None]
        h = np.where(valid, h_new, h)
        c = np.where(valid, c_new, c)
        hh[:, t, :] = np.where(valid, h_new, 0.0)
    return hh, h


if __name__ == "__main__":
    # Small shapes implied by the module: batch=4, seq=8, vocab=32, emb=16, hidden=32
    B, T, V, E, H = 4, 8, 32, 16, 32

    key = jax.random.PRNGKey(0)
    k_emb, k_wih, k_whh, k_bih, k_bhh, k_tok = jax.random.split(key, 6)

    # Embedding: uniform(-0.08, 0.08), row 0 zeroed (padding_idx=0).
    emb_table = jax.random.uniform(k_emb, (V, E), jnp.float32, -0.08, 0.08)
    emb_table = emb_table.at[0].set(0.0)

    # LSTM params, PyTorch-style uniform(-1/sqrt(H), 1/sqrt(H)); gate order (i,f,g,o).
    bound = 1.0 / np.sqrt(H)
    w_ih = jax.random.uniform(k_wih, (4, E, H), jnp.float32, -bound, bound)
    w_hh = jax.random.uniform(k_whh, (4, H, H), jnp.float32, -bound, bound)
    b_ih = jax.random.uniform(k_bih, (4, 1, H), jnp.float32, -bound, bound)
    b_hh = jax.random.uniform(k_bhh, (4, 1, H), jnp.float32, -bound, bound)
    b = b_ih + b_hh

    # Inputs: padded token ids (pad token = 0 past each length) and lengths.
    x_len = jnp.array([8, 5, 3, 1], dtype=jnp.int32)     # max == T
    x = jax.random.randint(k_tok, (B, T), 1, V, dtype=jnp.int32)
    pos = jnp.arange(T)[None, :]
    x = jnp.where(pos < x_len[:, None], x, 0)

    hh, h_t = encoder_rnn_forward(x, x_len, emb_table, w_ih, w_hh, b)
    hh = jax.block_until_ready(hh)
    h_t = jax.block_until_ready(h_t)

    # Correctness check against a pure-NumPy LSTM reference.
    emb_np = np.asarray(jnp.take(emb_table, x, axis=0))
    hh_ref, h_t_ref = _reference(emb_np, np.asarray(x_len), w_ih, w_hh, b)
    np.testing.assert_allclose(np.asarray(hh), hh_ref, rtol=1e-5, atol=1e-5)
    np.testing.assert_allclose(np.asarray(h_t), h_t_ref, rtol=1e-5, atol=1e-5)

    print("KERNEL_OK")
</pallas_src>

<mosaic_0001>
module attributes {stable_mosaic.version = 11 : i64} {
  func.func @lstm_recurrence_kernel(%arg0: memref<8x8x128xf32, #tpu.memory_space<vmem>>, %arg1: memref<32x128xf32, #tpu.memory_space<vmem>>, %arg2: memref<8x1xf32, #tpu.memory_space<vmem>>, %arg3: memref<8x256xf32, #tpu.memory_space<vmem>>) attributes {dimension_semantics = [], scalar_prefetch = 0 : i64, scratch_operands = 0 : i64, tpu.core_type = #tpu.core_type<tc>} {
    %c0 = arith.constant 0 : index
    %c0_0 = arith.constant 0 : index
    %0 = vector.load %arg1[%c0, %c0_0] : memref<32x128xf32, #tpu.memory_space<vmem>>, vector<32x128xf32>
    %c0_1 = arith.constant 0 : index
    %c0_2 = arith.constant 0 : index
    %1 = vector.load %arg2[%c0_1, %c0_2] : memref<8x1xf32, #tpu.memory_space<vmem>>, vector<8x1xf32>
    %c0_3 = arith.constant 0 : index
    %c0_4 = arith.constant 0 : index
    %c0_5 = arith.constant 0 : index
    %2 = vector.load %arg0[%c0_3, %c0_4, %c0_5] : memref<8x8x128xf32, #tpu.memory_space<vmem>>, vector<1x8x128xf32>
    %3 = vector.shape_cast %2 : vector<1x8x128xf32> to vector<8x128xf32>
    %4 = vector.extract_strided_slice %3 {offsets = [0, 0], sizes = [8, 96], strides = [1, 1]} : vector<8x128xf32> to vector<8x96xf32>
    %5 = arith.negf %4 : vector<8x96xf32>
    %6 = math.exp %5 : vector<8x96xf32>
    %cst = arith.constant 1.000000e+00 : f32
    %7 = vector.broadcast %cst : f32 to vector<8x96xf32>
    %8 = arith.addf %7, %6 : vector<8x96xf32>
    %9 = arith.divf %7, %8 : vector<8x96xf32>
    %10 = vector.extract_strided_slice %3 {offsets = [0, 96], sizes = [8, 32], strides = [1, 1]} : vector<8x128xf32> to vector<8x32xf32>
    %11 = math.tanh %10 : vector<8x32xf32>
    %12 = vector.extract_strided_slice %9 {offsets = [0, 0], sizes = [8, 32], strides = [1, 1]} : vector<8x96xf32> to vector<8x32xf32>
    %13 = vector.extract_strided_slice %9 {offsets = [0, 64], sizes = [8, 32], strides = [1, 1]} : vector<8x96xf32> to vector<8x32xf32>
    %14 = arith.mulf %12, %11 : vector<8x32xf32>
    %15 = math.tanh %14 : vector<8x32xf32>
    %16 = arith.mulf %13, %15 : vector<8x32xf32>
    %cst_6 = arith.constant 0.000000e+00 : f32
    %17 = vector.broadcast %cst_6 : f32 to vector<8x1xf32>
    %18 = arith.cmpf ogt, %1, %17 : vector<8x1xf32>
    %19 = arith.extui %18 : vector<8x1xi1> to vector<8x1xi32>
    %20 = arith.sitofp %19 : vector<8x1xi32> to vector<8x1xf32>
    %21 = vector.broadcast %20 : vector<8x1xf32> to vector<8x32xf32>
    %22 = arith.mulf %21, %16 : vector<8x32xf32>
    %c1 = arith.constant 1 : index
    %c0_7 = arith.constant 0 : index
    %c0_8 = arith.constant 0 : index
    %23 = vector.load %arg0[%c1, %c0_7, %c0_8] : memref<8x8x128xf32, #tpu.memory_space<vmem>>, vector<1x8x128xf32>
    %24 = vector.shape_cast %23 : vector<1x8x128xf32> to vector<8x128xf32>
    %cst_9 = arith.constant dense<0.000000e+00> : vector<8x128xf32>
    %25 = tpu.matmul %16, %0, %cst_9 {dimension_numbers = #tpu.dot_dimension_numbers<[1], [0], [0], [1], [0, 0, 1, 1], [], []>} : vector<8x32xf32>, vector<32x128xf32>, vector<8x128xf32> -> vector<8x128xf32>
    %26 = arith.addf %24, %25 : vector<8x128xf32>
    %27 = vector.extract_strided_slice %26 {offsets = [0, 0], sizes = [8, 96], strides = [1, 1]} : vector<8x128xf32> to vector<8x96xf32>
    %28 = arith.negf %27 : vector<8x96xf32>
    %29 = math.exp %28 : vector<8x96xf32>
    %cst_10 = arith.constant 1.000000e+00 : f32
    %30 = vector.broadcast %cst_10 : f32 to vector<8x96xf32>
    %31 = arith.addf %30, %29 : vector<8x96xf32>
    %32 = arith.divf %30, %31 : vector<8x96xf32>
    %33 = vector.extract_strided_slice %26 {offsets = [0, 96], sizes = [8, 32], strides = [1, 1]} : vector<8x128xf32> to vector<8x32xf32>
    %34 = math.tanh %33 : vector<8x32xf32>
    %35 = vector.extract_strided_slice %32 {offsets = [0, 0], sizes = [8, 32], strides = [1, 1]} : vector<8x96xf32> to vector<8x32xf32>
    %36 = vector.extract_strided_slice %32 {offsets = [0, 32], sizes = [8, 32], strides = [1, 1]} : vector<8x96xf32> to vector<8x32xf32>
    %37 = vector.extract_strided_slice %32 {offsets = [0, 64], sizes = [8, 32], strides = [1, 1]} : vector<8x96xf32> to vector<8x32xf32>
    %38 = arith.mulf %36, %14 : vector<8x32xf32>
    %39 = arith.mulf %35, %34 : vector<8x32xf32>
    %40 = arith.addf %38, %39 : vector<8x32xf32>
    %41 = math.tanh %40 : vector<8x32xf32>
    %42 = arith.mulf %37, %41 : vector<8x32xf32>
    %cst_11 = arith.constant 1.000000e+00 : f32
    %43 = vector.broadcast %cst_11 : f32 to vector<8x1xf32>
    %44 = arith.cmpf ogt, %1, %43 : vector<8x1xf32>
    %45 = arith.extui %44 : vector<8x1xi1> to vector<8x1xi32>
    %46 = arith.sitofp %45 : vector<8x1xi32> to vector<8x1xf32>
    %47 = vector.broadcast %46 : vector<8x1xf32> to vector<8x32xf32>
    %48 = arith.mulf %47, %42 : vector<8x32xf32>
    %c2 = arith.constant 2 : index
    %c0_12 = arith.constant 0 : index
    %c0_13 = arith.constant 0 : index
    %49 = vector.load %arg0[%c2, %c0_12, %c0_13] : memref<8x8x128xf32, #tpu.memory_space<vmem>>, vector<1x8x128xf32>
    %50 = vector.shape_cast %49 : vector<1x8x128xf32> to vector<8x128xf32>
    %cst_14 = arith.constant dense<0.000000e+00> : vector<8x128xf32>
    %51 = tpu.matmul %42, %0, %cst_14 {dimension_numbers = #tpu.dot_dimension_numbers<[1], [0], [0], [1], [0, 0, 1, 1], [], []>} : vector<8x32xf32>, vector<32x128xf32>, vector<8x128xf32> -> vector<8x128xf32>
    %52 = arith.addf %50, %51 : vector<8x128xf32>
    %53 = vector.extract_strided_slice %52 {offsets = [0, 0], sizes = [8, 96], strides = [1, 1]} : vector<8x128xf32> to vector<8x96xf32>
    %54 = arith.negf %53 : vector<8x96xf32>
    %55 = math.exp %54 : vector<8x96xf32>
    %cst_15 = arith.constant 1.000000e+00 : f32
    %56 = vector.broadcast %cst_15 : f32 to vector<8x96xf32>
    %57 = arith.addf %56, %55 : vector<8x96xf32>
    %58 = arith.divf %56, %57 : vector<8x96xf32>
    %59 = vector.extract_strided_slice %52 {offsets = [0, 96], sizes = [8, 32], strides = [1, 1]} : vector<8x128xf32> to vector<8x32xf32>
    %60 = math.tanh %59 : vector<8x32xf32>
    %61 = vector.extract_strided_slice %58 {offsets = [0, 0], sizes = [8, 32], strides = [1, 1]} : vector<8x96xf32> to vector<8x32xf32>
    %62 = vector.extract_strided_slice %58 {offsets = [0, 32], sizes = [8, 32], strides = [1, 1]} : vector<8x96xf32> to vector<8x32xf32>
    %63 = vector.extract_strided_slice %58 {offsets = [0, 64], sizes = [8, 32], strides = [1, 1]} : vector<8x96xf32> to vector<8x32xf32>
    %64 = arith.mulf %62, %40 : vector<8x32xf32>
    %65 = arith.mulf %61, %60 : vector<8x32xf32>
    %66 = arith.addf %64, %65 : vector<8x32xf32>
    %67 = math.tanh %66 : vector<8x32xf32>
    %68 = arith.mulf %63, %67 : vector<8x32xf32>
    %cst_16 = arith.constant 2.000000e+00 : f32
    %69 = vector.broadcast %cst_16 : f32 to vector<8x1xf32>
    %70 = arith.cmpf ogt, %1, %69 : vector<8x1xf32>
    %71 = arith.extui %70 : vector<8x1xi1> to vector<8x1xi32>
    %72 = arith.sitofp %71 : vector<8x1xi32> to vector<8x1xf32>
    %73 = vector.broadcast %72 : vector<8x1xf32> to vector<8x32xf32>
    %74 = arith.mulf %73, %68 : vector<8x32xf32>
    %c3 = arith.constant 3 : index
    %c0_17 = arith.constant 0 : index
    %c0_18 = arith.constant 0 : index
    %75 = vector.load %arg0[%c3, %c0_17, %c0_18] : memref<8x8x128xf32, #tpu.memory_space<vmem>>, vector<1x8x128xf32>
    %76 = vector.shape_cast %75 : vector<1x8x128xf32> to vector<8x128xf32>
    %cst_19 = arith.constant dense<0.000000e+00> : vector<8x128xf32>
    %77 = tpu.matmul %68, %0, %cst_19 {dimension_numbers = #tpu.dot_dimension_numbers<[1], [0], [0], [1], [0, 0, 1, 1], [], []>} : vector<8x32xf32>, vector<32x128xf32>, vector<8x128xf32> -> vector<8x128xf32>
    %78 = arith.addf %76, %77 : vector<8x128xf32>
    %79 = vector.extract_strided_slice %78 {offsets = [0, 0], sizes = [8, 96], strides = [1, 1]} : vector<8x128xf32> to vector<8x96xf32>
    %80 = arith.negf %79 : vector<8x96xf32>
    %81 = math.exp %80 : vector<8x96xf32>
    %cst_20 = arith.constant 1.000000e+00 : f32
    %82 = vector.broadcast %cst_20 : f32 to vector<8x96xf32>
    %83 = arith.addf %82, %81 : vector<8x96xf32>
    %84 = arith.divf %82, %83 : vector<8x96xf32>
    %85 = vector.extract_strided_slice %78 {offsets = [0, 96], sizes = [8, 32], strides = [1, 1]} : vector<8x128xf32> to vector<8x32xf32>
    %86 = math.tanh %85 : vector<8x32xf32>
    %87 = vector.extract_strided_slice %84 {offsets = [0, 0], sizes = [8, 32], strides = [1, 1]} : vector<8x96xf32> to vector<8x32xf32>
    %88 = vector.extract_strided_slice %84 {offsets = [0, 32], sizes = [8, 32], strides = [1, 1]} : vector<8x96xf32> to vector<8x32xf32>
    %89 = vector.extract_strided_slice %84 {offsets = [0, 64], sizes = [8, 32], strides = [1, 1]} : vector<8x96xf32> to vector<8x32xf32>
    %90 = arith.mulf %88, %66 : vector<8x32xf32>
    %91 = arith.mulf %87, %86 : vector<8x32xf32>
    %92 = arith.addf %90, %91 : vector<8x32xf32>
    %93 = math.tanh %92 : vector<8x32xf32>
    %94 = arith.mulf %89, %93 : vector<8x32xf32>
    %cst_21 = arith.constant 3.000000e+00 : f32
    %95 = vector.broadcast %cst_21 : f32 to vector<8x1xf32>
    %96 = arith.cmpf ogt, %1, %95 : vector<8x1xf32>
    %97 = arith.extui %96 : vector<8x1xi1> to vector<8x1xi32>
    %98 = arith.sitofp %97 : vector<8x1xi32> to vector<8x1xf32>
    %99 = vector.broadcast %98 : vector<8x1xf32> to vector<8x32xf32>
    %100 = arith.mulf %99, %94 : vector<8x32xf32>
    %c4 = arith.constant 4 : index
    %c0_22 = arith.constant 0 : index
    %c0_23 = arith.constant 0 : index
    %101 = vector.load %arg0[%c4, %c0_22, %c0_23] : memref<8x8x128xf32, #tpu.memory_space<vmem>>, vector<1x8x128xf32>
    %102 = vector.shape_cast %101 : vector<1x8x128xf32> to vector<8x128xf32>
    %cst_24 = arith.constant dense<0.000000e+00> : vector<8x128xf32>
    %103 = tpu.matmul %94, %0, %cst_24 {dimension_numbers = #tpu.dot_dimension_numbers<[1], [0], [0], [1], [0, 0, 1, 1], [], []>} : vector<8x32xf32>, vector<32x128xf32>, vector<8x128xf32> -> vector<8x128xf32>
    %104 = arith.addf %102, %103 : vector<8x128xf32>
    %105 = vector.extract_strided_slice %104 {offsets = [0, 0], sizes = [8, 96], strides = [1, 1]} : vector<8x128xf32> to vector<8x96xf32>
    %106 = arith.negf %105 : vector<8x96xf32>
    %107 = math.exp %106 : vector<8x96xf32>
    %cst_25 = arith.constant 1.000000e+00 : f32
    %108 = vector.broadcast %cst_25 : f32 to vector<8x96xf32>
    %109 = arith.addf %108, %107 : vector<8x96xf32>
    %110 = arith.divf %108, %109 : vector<8x96xf32>
    %111 = vector.extract_strided_slice %104 {offsets = [0, 96], sizes = [8, 32], strides = [1, 1]} : vector<8x128xf32> to vector<8x32xf32>
    %112 = math.tanh %111 : vector<8x32xf32>
    %113 = vector.extract_strided_slice %110 {offsets = [0, 0], sizes = [8, 32], strides = [1, 1]} : vector<8x96xf32> to vector<8x32xf32>
    %114 = vector.extract_strided_slice %110 {offsets = [0, 32], sizes = [8, 32], strides = [1, 1]} : vector<8x96xf32> to vector<8x32xf32>
    %115 = vector.extract_strided_slice %110 {offsets = [0, 64], sizes = [8, 32], strides = [1, 1]} : vector<8x96xf32> to vector<8x32xf32>
    %116 = arith.mulf %114, %92 : vector<8x32xf32>
    %117 = arith.mulf %113, %112 : vector<8x32xf32>
    %118 = arith.addf %116, %117 : vector<8x32xf32>
    %119 = math.tanh %118 : vector<8x32xf32>
    %120 = arith.mulf %115, %119 : vector<8x32xf32>
    %cst_26 = arith.constant 4.000000e+00 : f32
    %121 = vector.broadcast %cst_26 : f32 to vector<8x1xf32>
    %122 = arith.cmpf ogt, %1, %121 : vector<8x1xf32>
    %123 = arith.extui %122 : vector<8x1xi1> to vector<8x1xi32>
    %124 = arith.sitofp %123 : vector<8x1xi32> to vector<8x1xf32>
    %125 = vector.broadcast %124 : vector<8x1xf32> to vector<8x32xf32>
    %126 = arith.mulf %125, %120 : vector<8x32xf32>
    %c5 = arith.constant 5 : index
    %c0_27 = arith.constant 0 : index
    %c0_28 = arith.constant 0 : index
    %127 = vector.load %arg0[%c5, %c0_27, %c0_28] : memref<8x8x128xf32, #tpu.memory_space<vmem>>, vector<1x8x128xf32>
    %128 = vector.shape_cast %127 : vector<1x8x128xf32> to vector<8x128xf32>
    %cst_29 = arith.constant dense<0.000000e+00> : vector<8x128xf32>
    %129 = tpu.matmul %120, %0, %cst_29 {dimension_numbers = #tpu.dot_dimension_numbers<[1], [0], [0], [1], [0, 0, 1, 1], [], []>} : vector<8x32xf32>, vector<32x128xf32>, vector<8x128xf32> -> vector<8x128xf32>
    %130 = arith.addf %128, %129 : vector<8x128xf32>
    %131 = vector.extract_strided_slice %130 {offsets = [0, 0], sizes = [8, 96], strides = [1, 1]} : vector<8x128xf32> to vector<8x96xf32>
    %132 = arith.negf %131 : vector<8x96xf32>
    %133 = math.exp %132 : vector<8x96xf32>
    %cst_30 = arith.constant 1.000000e+00 : f32
    %134 = vector.broadcast %cst_30 : f32 to vector<8x96xf32>
    %135 = arith.addf %134, %133 : vector<8x96xf32>
    %136 = arith.divf %134, %135 : vector<8x96xf32>
    %137 = vector.extract_strided_slice %130 {offsets = [0, 96], sizes = [8, 32], strides = [1, 1]} : vector<8x128xf32> to vector<8x32xf32>
    %138 = math.tanh %137 : vector<8x32xf32>
    %139 = vector.extract_strided_slice %136 {offsets = [0, 0], sizes = [8, 32], strides = [1, 1]} : vector<8x96xf32> to vector<8x32xf32>
    %140 = vector.extract_strided_slice %136 {offsets = [0, 32], sizes = [8, 32], strides = [1, 1]} : vector<8x96xf32> to vector<8x32xf32>
    %141 = vector.extract_strided_slice %136 {offsets = [0, 64], sizes = [8, 32], strides = [1, 1]} : vector<8x96xf32> to vector<8x32xf32>
    %142 = arith.mulf %140, %118 : vector<8x32xf32>
    %143 = arith.mulf %139, %138 : vector<8x32xf32>
    %144 = arith.addf %142, %143 : vector<8x32xf32>
    %145 = math.tanh %144 : vector<8x32xf32>
    %146 = arith.mulf %141, %145 : vector<8x32xf32>
    %cst_31 = arith.constant 5.000000e+00 : f32
    %147 = vector.broadcast %cst_31 : f32 to vector<8x1xf32>
    %148 = arith.cmpf ogt, %1, %147 : vector<8x1xf32>
    %149 = arith.extui %148 : vector<8x1xi1> to vector<8x1xi32>
    %150 = arith.sitofp %149 : vector<8x1xi32> to vector<8x1xf32>
    %151 = vector.broadcast %150 : vector<8x1xf32> to vector<8x32xf32>
    %152 = arith.mulf %151, %146 : vector<8x32xf32>
    %c6 = arith.constant 6 : index
    %c0_32 = arith.constant 0 : index
    %c0_33 = arith.constant 0 : index
    %153 = vector.load %arg0[%c6, %c0_32, %c0_33] : memref<8x8x128xf32, #tpu.memory_space<vmem>>, vector<1x8x128xf32>
    %154 = vector.shape_cast %153 : vector<1x8x128xf32> to vector<8x128xf32>
    %cst_34 = arith.constant dense<0.000000e+00> : vector<8x128xf32>
    %155 = tpu.matmul %146, %0, %cst_34 {dimension_numbers = #tpu.dot_dimension_numbers<[1], [0], [0], [1], [0, 0, 1, 1], [], []>} : vector<8x32xf32>, vector<32x128xf32>, vector<8x128xf32> -> vector<8x128xf32>
    %156 = arith.addf %154, %155 : vector<8x128xf32>
    %157 = vector.extract_strided_slice %156 {offsets = [0, 0], sizes = [8, 96], strides = [1, 1]} : vector<8x128xf32> to vector<8x96xf32>
    %158 = arith.negf %157 : vector<8x96xf32>
    %159 = math.exp %158 : vector<8x96xf32>
    %cst_35 = arith.constant 1.000000e+00 : f32
    %160 = vector.broadcast %cst_35 : f32 to vector<8x96xf32>
    %161 = arith.addf %160, %159 : vector<8x96xf32>
    %162 = arith.divf %160, %161 : vector<8x96xf32>
    %163 = vector.extract_strided_slice %156 {offsets = [0, 96], sizes = [8, 32], strides = [1, 1]} : vector<8x128xf32> to vector<8x32xf32>
    %164 = math.tanh %163 : vector<8x32xf32>
    %165 = vector.extract_strided_slice %162 {offsets = [0, 0], sizes = [8, 32], strides = [1, 1]} : vector<8x96xf32> to vector<8x32xf32>
    %166 = vector.extract_strided_slice %162 {offsets = [0, 32], sizes = [8, 32], strides = [1, 1]} : vector<8x96xf32> to vector<8x32xf32>
    %167 = vector.extract_strided_slice %162 {offsets = [0, 64], sizes = [8, 32], strides = [1, 1]} : vector<8x96xf32> to vector<8x32xf32>
    %168 = arith.mulf %166, %144 : vector<8x32xf32>
    %169 = arith.mulf %165, %164 : vector<8x32xf32>
    %170 = arith.addf %168, %169 : vector<8x32xf32>
    %171 = math.tanh %170 : vector<8x32xf32>
    %172 = arith.mulf %167, %171 : vector<8x32xf32>
    %cst_36 = arith.constant 6.000000e+00 : f32
    %173 = vector.broadcast %cst_36 : f32 to vector<8x1xf32>
    %174 = arith.cmpf ogt, %1, %173 : vector<8x1xf32>
    %175 = arith.extui %174 : vector<8x1xi1> to vector<8x1xi32>
    %176 = arith.sitofp %175 : vector<8x1xi32> to vector<8x1xf32>
    %177 = vector.broadcast %176 : vector<8x1xf32> to vector<8x32xf32>
    %178 = arith.mulf %177, %172 : vector<8x32xf32>
    %c7 = arith.constant 7 : index
    %c0_37 = arith.constant 0 : index
    %c0_38 = arith.constant 0 : index
    %179 = vector.load %arg0[%c7, %c0_37, %c0_38] : memref<8x8x128xf32, #tpu.memory_space<vmem>>, vector<1x8x128xf32>
    %180 = vector.shape_cast %179 : vector<1x8x128xf32> to vector<8x128xf32>
    %cst_39 = arith.constant dense<0.000000e+00> : vector<8x128xf32>
    %181 = tpu.matmul %172, %0, %cst_39 {dimension_numbers = #tpu.dot_dimension_numbers<[1], [0], [0], [1], [0, 0, 1, 1], [], []>} : vector<8x32xf32>, vector<32x128xf32>, vector<8x128xf32> -> vector<8x128xf32>
    %182 = arith.addf %180, %181 : vector<8x128xf32>
    %183 = vector.extract_strided_slice %182 {offsets = [0, 0], sizes = [8, 96], strides = [1, 1]} : vector<8x128xf32> to vector<8x96xf32>
    %184 = arith.negf %183 : vector<8x96xf32>
    %185 = math.exp %184 : vector<8x96xf32>
    %cst_40 = arith.constant 1.000000e+00 : f32
    %186 = vector.broadcast %cst_40 : f32 to vector<8x96xf32>
    %187 = arith.addf %186, %185 : vector<8x96xf32>
    %188 = arith.divf %186, %187 : vector<8x96xf32>
    %189 = vector.extract_strided_slice %182 {offsets = [0, 96], sizes = [8, 32], strides = [1, 1]} : vector<8x128xf32> to vector<8x32xf32>
    %190 = math.tanh %189 : vector<8x32xf32>
    %191 = vector.extract_strided_slice %188 {offsets = [0, 0], sizes = [8, 32], strides = [1, 1]} : vector<8x96xf32> to vector<8x32xf32>
    %192 = vector.extract_strided_slice %188 {offsets = [0, 32], sizes = [8, 32], strides = [1, 1]} : vector<8x96xf32> to vector<8x32xf32>
    %193 = vector.extract_strided_slice %188 {offsets = [0, 64], sizes = [8, 32], strides = [1, 1]} : vector<8x96xf32> to vector<8x32xf32>
    %194 = arith.mulf %192, %170 : vector<8x32xf32>
    %195 = arith.mulf %191, %190 : vector<8x32xf32>
    %196 = arith.addf %194, %195 : vector<8x32xf32>
    %197 = math.tanh %196 : vector<8x32xf32>
    %198 = arith.mulf %193, %197 : vector<8x32xf32>
    %cst_41 = arith.constant 7.000000e+00 : f32
    %199 = vector.broadcast %cst_41 : f32 to vector<8x1xf32>
    %200 = arith.cmpf ogt, %1, %199 : vector<8x1xf32>
    %201 = arith.extui %200 : vector<8x1xi1> to vector<8x1xi32>
    %202 = arith.sitofp %201 : vector<8x1xi32> to vector<8x1xf32>
    %203 = vector.broadcast %202 : vector<8x1xf32> to vector<8x32xf32>
    %204 = arith.mulf %203, %198 : vector<8x32xf32>
    %205 = tpu.concatenate %22, %48, %74, %100, %126, %152, %178, %204 in 1 : vector<8x32xf32>, vector<8x32xf32>, vector<8x32xf32>, vector<8x32xf32>, vector<8x32xf32>, vector<8x32xf32>, vector<8x32xf32>, vector<8x32xf32> -> vector<8x256xf32>
    %c0_42 = arith.constant 0 : index
    %c0_43 = arith.constant 0 : index
    %206 = vector.load %arg3[%c0_42, %c0_43] : memref<8x256xf32, #tpu.memory_space<vmem>>, vector<8x256xf32>
    tpu.vector_store %arg3[%c0_42, %c0_43], %205 {strides = array<i32>} : memref<8x256xf32, #tpu.memory_space<vmem>>, vector<8x256xf32>,
    return
  }
}

</mosaic_0001>

<llo_original>
// kernel: tpu_custom_call.1
$region0: #{tpu_custom_call.1}
  #allocation0 [shape = 'u32[]', space=smem, size = 0x4, offset = 0x4, fixed_abs, tag = 'smem constant byte address 0x4 - core index']
  #allocation1 [shape = 'u32[72,128]{1,0:T(1,128)}', space=vmem, size = 0x9000, scoped, tag = 'internal scratch']
  %s0 = inlined_call_operand.hbm [shape: f32[8,8,128], index: 0, kind: input, shape index: {}]
  %s1 = inlined_call_operand.hbm [shape: f32[32,128], index: 1, kind: input, shape index: {}]
  %s2 = inlined_call_operand.vmem [shape: f32[8,1], index: 2, kind: input, shape index: {}]
  %s3 = inlined_call_operand.hbm [shape: f32[8,256], index: 3, kind: output, shape index: {}]
  %s4 = sld [smem:[#allocation0]]
  $region30: #{tpu_custom_call.1} parent=0
    _
  %s6 = ssub.s32 1, %s4
  %s7 = scalar_select 0, %s6, %s4
  $region1: #{tpu_custom_call.1} parent=0
    #allocation2 [shape = 'u8[32768]{0}', space=vmem, size = 0x8000, scoped, tag = 'input window, operand 0, single buffered']
    #allocation3 [shape = 's32[1]{0}', space=sflag, size = 0x4, scoped, tag = 'scoped memory for tpu_custom_call.1']
    #allocation4 [shape = 's32[1]{0}', space=sflag, size = 0x4, scoped, tag = 'scoped memory for tpu_custom_call.1']
    #allocation5 [shape = 'u8[16384]{0}', space=vmem, size = 0x4000, scoped, tag = 'input window, operand 1, single buffered']
    #allocation6 [shape = 's32[1]{0}', space=sflag, size = 0x4, scoped, tag = 'scoped memory for tpu_custom_call.1']
    #allocation7 [shape = 'u8[8192]{0}', space=vmem, size = 0x2000, scoped, tag = 'output window, operand 0, single buffered']
    %8 = vsyncpa [#allocation3], 0
    %9 = vsyncpa [#allocation6], 0
    %10 = vsyncpa [#allocation4], 0
    // Predicated region
    $region2: #{tpu_custom_call.1} parent=1 // pred_check
      _
    $region3: #{tpu_custom_call.1} parent=1 // pred_check_branch
      %12 = sbr.rel (0) target = $region5
    $region4: #{tpu_custom_call.1} parent=1 // pred_region
      %14 = vsyncadd [#allocation3], 0
      %s15 = sshll.u32 %s0, 4
      %s16 = int_to_ptr.hbm [resolvable:$true] %s15
      %s17 = sshll.u32 [#allocation2], 4
      %s18 = int_to_ptr.vmem [resolvable:$true] %s17
      %23 = dma.hbm_to_vmem [thread:$0]  %s16, 1024, %s18, [#allocation3], 128, 128, 8
    $region5: #{tpu_custom_call.1} parent=1 // pred_fallthru
      _
    // Predicated region
    $region6: #{tpu_custom_call.1} parent=1 // pred_check
      _
    $region7: #{tpu_custom_call.1} parent=1 // pred_check_branch
      %25 = sbr.rel (0) target = $region9
    $region8: #{tpu_custom_call.1} parent=1 // pred_region
      %27 = vsyncadd [#allocation6], 0
      %s28 = sshll.u32 %s1, 4
      %s29 = int_to_ptr.hbm [resolvable:$true] %s28
      %s30 = sshll.u32 [#allocation5], 4
      %s31 = int_to_ptr.vmem [resolvable:$true] %s30
      %36 = dma.hbm_to_vmem [thread:$0]  %s29, 512, %s31, [#allocation6], 128, 128, 8
    $region9: #{tpu_custom_call.1} parent=1 // pred_fallthru
      _
    // Predicated region
    $region10: #{tpu_custom_call.1} parent=1 // pred_check
      _
    $region11: #{tpu_custom_call.1} parent=1 // pred_check_branch
      %38 = sbr.rel (0) target = $region13
    $region12: #{tpu_custom_call.1} parent=1 // pred_region
      _
    $region13: #{tpu_custom_call.1} parent=1 // pred_fallthru
      _
    // Predicated region
    $region14: #{tpu_custom_call.1} parent=1 // pred_check
      _
    $region15: #{tpu_custom_call.1} parent=1 // pred_check_branch
      %40 = sbr.rel (0) target = $region17
    $region16: #{tpu_custom_call.1} parent=1 // pred_region
      %42 = dma.done [#allocation3], 1024
    $region17: #{tpu_custom_call.1} parent=1 // pred_fallthru
      _
    // Predicated region
    $region18: #{tpu_custom_call.1} parent=1 // pred_check
      _
    $region19: #{tpu_custom_call.1} parent=1 // pred_check_branch
      %44 = sbr.rel (0) target = $region21
    $region20: #{tpu_custom_call.1} parent=1 // pred_region
      %46 = dma.done [#allocation6], 512
    $region21: #{tpu_custom_call.1} parent=1 // pred_fallthru
      _
    %v47 = vld [vmem:[#allocation5] sm:$0xff]
    %v48 = vld [vmem:[#allocation5 + $0x8] sm:$0xff]
    %v49 = vld [vmem:[#allocation5 + $0x10] sm:$0xff]
    %v50 = vld [vmem:[#allocation5 + $0x18] sm:$0xff]
    %v51 = vld [vmem:[%s2] sm:$0xff]
    %v52 = vld [vmem:[#allocation2] sm:$0xff]
    %v53 = vxor.u32 %v52, 2147483648
    %v54 = vmul.f32 %v53, 1.442695
    %v55 = vpow.pop %v54
    %v56 = vadd.f32 %v55, 1.0
    %v57 = vrcp.pop %v56
    %v58 = vmul.f32 %v56, %v57
    %v59 = vsub.f32 1.0, %v58
    %v60 = vmul.f32 %v57, %v59
    %v61 = vadd.f32 %v57, %v60
    %vm62 = vweird.f32 %v56
    %vm63 = vweird.f32 %v57
    %vm64 = vmor %vm62, %vm63
    %v65 = vsel %vm64, %v57, %v61
    %v66 = vand.u32 2147483647, %v56
    %vm67 = vcmp.eq.f32.partialorder %v66, 8.507059e+37
    %v68 = vand.u32 %v56, 2147483648
    %v69 = vor.u32 1.1754944e-38, %v68
    %v70 = vsel %vm67, %v69, %v65
    %v71 = vmul.f32 1.0, %v70
    %v72 = vtanh.pop %v52
    %74 = vrot.lane.b32.xlu0 %v72, 32
    %v75 = vpop.permute.xlu0 %74
    %v77 = vmul.f32 %v71, %v75
    %v78 = vtanh.pop %v77
    %80 = vrot.lane.b32.xlu0 %v78, 64
    %v81 = vpop.permute.xlu0 %80
    %v83 = vmul.f32 %v71, %v81
    %vm84 = vcmp.gt.f32.partialorder %v51, 0.0
    %v85 = vsel %vm84, 1, 0
    %v86 = vcvt.s32.f32 %v85
    %88 = vset.pattern.permute.xlu0 0
    %89 = vperm.xlu0 %88, %v86
    %v90 = vpop.permute.xlu0 %89
    %v92 = vmul.f32 %v90, %v83
    %s93 = scalar_lea.vmem [#allocation2], 8
    %v94 = vld [vmem:[%s93] sm:$0xff]
    %96 = vrot.lane.b32.xlu0 %v83, 64
    %v97 = vpop.permute.xlu0 %96
    %vm98 = vcmask 261120
    %v99 = vsel %vm98, %v97, 0
    %101 = vmatpush.msra.mxu0 0.0
    %102 = vmatpush.msra.mxu0 0.0
    %103 = vmatpush.msra.mxu0 0.0
    %104 = vmatpush.msra.mxu0 0.0
    %105 = vmatpush.msra.mxu0 0.0
    %106 = vmatpush.msra.mxu0 0.0
    %107 = vmatpush.msra.mxu0 0.0
    %108 = vmatpush.msra.mxu0 0.0
    %109 = vmatpush.msra.mxu0 0.0
    %110 = vmatpush.msra.mxu0 0.0
    %111 = vmatpush.msra.mxu0 0.0
    %112 = vmatpush.msra.mxu0 0.0
    %113 = vmatpush.msra.mxu0 %v50
    %114 = vmatpush.msra.mxu0 %v49
    %115 = vmatpush.msra.mxu0 %v48
    %116 = vmatpush.msra.mxu0 %v47
    %117 = vmatmul.f32.gmra.mxu0 %v99
    %v118 = vpop.f32.mrf.mxu0
    %v119 = vadd.f32 0.0, %v118
    %120 = vdwg.mxu0
    %v121 = vadd.f32 %v94, %v119
    %v122 = vxor.u32 %v121, 2147483648
    %v123 = vmul.f32 %v122, 1.442695
    %v124 = vpow.pop %v123
    %v125 = vadd.f32 %v124, 1.0
    %v126 = vrcp.pop %v125
    %v127 = vmul.f32 %v125, %v126
    %v128 = vsub.f32 1.0, %v127
    %v129 = vmul.f32 %v126, %v128
    %v130 = vadd.f32 %v126, %v129
    %vm131 = vweird.f32 %v125
    %vm132 = vweird.f32 %v126
    %vm133 = vmor %vm131, %vm132
    %v134 = vsel %vm133, %v126, %v130
    %v135 = vand.u32 2147483647, %v125
    %vm136 = vcmp.eq.f32.partialorder %v135, 8.507059e+37
    %v137 = vand.u32 %v125, 2147483648
    %v138 = vor.u32 1.1754944e-38, %v137
    %v139 = vsel %vm136, %v138, %v134
    %v140 = vmul.f32 1.0, %v139
    %v141 = vtanh.pop %v121
    %143 = vrot.lane.b32.xlu0 %v77, 32
    %v144 = vpop.permute.xlu0 %143
    %v146 = vmul.f32 %v140, %v144
    %148 = vrot.lane.b32.xlu0 %v141, 32
    %v149 = vpop.permute.xlu0 %148
    %v151 = vmul.f32 %v140, %v149
    %153 = vrot.lane.b32.xlu0 %v151, 32
    %v154 = vpop.permute.xlu0 %153
    %v156 = vadd.f32 %v146, %v154
    %v157 = vtanh.pop %v156
    %159 = vrot.lane.b32.xlu0 %v157, 32
    %v160 = vpop.permute.xlu0 %159
    %v162 = vmul.f32 %v140, %v160
    %vm163 = vcmp.gt.f32.partialorder %v51, 1.0
    %v164 = vsel %vm163, 1, 0
    %v165 = vcvt.s32.f32 %v164
    %167 = vset.pattern.permute.xlu0 0
    %168 = vperm.xlu0 %167, %v165
    %v169 = vpop.permute.xlu0 %168
    %v171 = vmul.f32 %v169, %v162
    %s172 = scalar_lea.vmem [#allocation2], 16
    %v173 = vld [vmem:[%s172] sm:$0xff]
    %175 = vrot.lane.b32.xlu0 %v162, 64
    %v176 = vpop.permute.xlu0 %175
    %v177 = vsel %vm98, %v176, 0
    %179 = vmatpush.msra.mxu0 0.0
    %180 = vmatpush.msra.mxu0 0.0
    %181 = vmatpush.msra.mxu0 0.0
    %182 = vmatpush.msra.mxu0 0.0
    %183 = vmatpush.msra.mxu0 0.0
    %184 = vmatpush.msra.mxu0 0.0
    %185 = vmatpush.msra.mxu0 0.0
    %186 = vmatpush.msra.mxu0 0.0
    %187 = vmatpush.msra.mxu0 0.0
    %188 = vmatpush.msra.mxu0 0.0
    %189 = vmatpush.msra.mxu0 0.0
    %190 = vmatpush.msra.mxu0 0.0
    %191 = vmatpush.msra.mxu0 %v50
    %192 = vmatpush.msra.mxu0 %v49
    %193 = vmatpush.msra.mxu0 %v48
    %194 = vmatpush.msra.mxu0 %v47
    %195 = vmatmul.f32.gmra.mxu0 %v177
    %v196 = vpop.f32.mrf.mxu0
    %v197 = vadd.f32 0.0, %v196
    %198 = vdwg.mxu0
    %v199 = vadd.f32 %v173, %v197
    %v200 = vxor.u32 %v199, 2147483648
    %v201 = vmul.f32 %v200, 1.442695
    %v202 = vpow.pop %v201
    %v203 = vadd.f32 %v202, 1.0
    %v204 = vrcp.pop %v203
    %v205 = vmul.f32 %v203, %v204
    %v206 = vsub.f32 1.0, %v205
    %v207 = vmul.f32 %v204, %v206
    %v208 = vadd.f32 %v204, %v207
    %vm209 = vweird.f32 %v203
    %vm210 = vweird.f32 %v204
    %vm211 = vmor %vm209, %vm210
    %v212 = vsel %vm211, %v204, %v208
    %v213 = vand.u32 2147483647, %v203
    %vm214 = vcmp.eq.f32.partialorder %v213, 8.507059e+37
    %v215 = vand.u32 %v203, 2147483648
    %v216 = vor.u32 1.1754944e-38, %v215
    %v217 = vsel %vm214, %v216, %v212
    %v218 = vmul.f32 1.0, %v217
    %v219 = vtanh.pop %v199
    %v220 = vmul.f32 %v218, %v156
    %222 = vrot.lane.b32.xlu0 %v219, 32
    %v223 = vpop.permute.xlu0 %222
    %v225 = vmul.f32 %v218, %v223
    %227 = vrot.lane.b32.xlu0 %v225, 32
    %v228 = vpop.permute.xlu0 %227
    %v230 = vadd.f32 %v220, %v228
    %v231 = vtanh.pop %v230
    %233 = vrot.lane.b32.xlu0 %v231, 32
    %v234 = vpop.permute.xlu0 %233
    %v236 = vmul.f32 %v218, %v234
    %vm237 = vcmp.gt.f32.partialorder %v51, 2.0
    %v238 = vsel %vm237, 1, 0
    %v239 = vcvt.s32.f32 %v238
    %241 = vset.pattern.permute.xlu0 0
    %242 = vperm.xlu0 %241, %v239
    %v243 = vpop.permute.xlu0 %242
    %v245 = vmul.f32 %v243, %v236
    %s246 = scalar_lea.vmem [#allocation2], 24
    %v247 = vld [vmem:[%s246] sm:$0xff]
    %249 = vrot.lane.b32.xlu0 %v236, 64
    %v250 = vpop.permute.xlu0 %249
    %v251 = vsel %vm98, %v250, 0
    %253 = vmatpush.msra.mxu0 0.0
    %254 = vmatpush.msra.mxu0 0.0
    %255 = vmatpush.msra.mxu0 0.0
    %256 = vmatpush.msra.mxu0 0.0
    %257 = vmatpush.msra.mxu0 0.0
    %258 = vmatpush.msra.mxu0 0.0
    %259 = vmatpush.msra.mxu0 0.0
    %260 = vmatpush.msra.mxu0 0.0
    %261 = vmatpush.msra.mxu0 0.0
    %262 = vmatpush.msra.mxu0 0.0
    %263 = vmatpush.msra.mxu0 0.0
    %264 = vmatpush.msra.mxu0 0.0
    %265 = vmatpush.msra.mxu0 %v50
    %266 = vmatpush.msra.mxu0 %v49
    %267 = vmatpush.msra.mxu0 %v48
    %268 = vmatpush.msra.mxu0 %v47
    %269 = vmatmul.f32.gmra.mxu0 %v251
    %v270 = vpop.f32.mrf.mxu0
    %v271 = vadd.f32 0.0, %v270
    %272 = vdwg.mxu0
    %v273 = vadd.f32 %v247, %v271
    %v274 = vxor.u32 %v273, 2147483648
    %v275 = vmul.f32 %v274, 1.442695
    %v276 = vpow.pop %v275
    %v277 = vadd.f32 %v276, 1.0
    %v278 = vrcp.pop %v277
    %v279 = vmul.f32 %v277, %v278
    %v280 = vsub.f32 1.0, %v279
    %v281 = vmul.f32 %v278, %v280
    %v282 = vadd.f32 %v278, %v281
    %vm283 = vweird.f32 %v277
    %vm284 = vweird.f32 %v278
    %vm285 = vmor %vm283, %vm284
    %v286 = vsel %vm285, %v278, %v282
    %v287 = vand.u32 2147483647, %v277
    %vm288 = vcmp.eq.f32.partialorder %v287, 8.507059e+37
    %v289 = vand.u32 %v277, 2147483648
    %v290 = vor.u32 1.1754944e-38, %v289
    %v291 = vsel %vm288, %v290, %v286
    %v292 = vmul.f32 1.0, %v291
    %v293 = vtanh.pop %v273
    %v294 = vmul.f32 %v292, %v230
    %296 = vrot.lane.b32.xlu0 %v293, 32
    %v297 = vpop.permute.xlu0 %296
    %v299 = vmul.f32 %v292, %v297
    %301 = vrot.lane.b32.xlu0 %v299, 32
    %v302 = vpop.permute.xlu0 %301
    %v304 = vadd.f32 %v294, %v302
    %v305 = vtanh.pop %v304
    %307 = vrot.lane.b32.xlu0 %v305, 32
    %v308 = vpop.permute.xlu0 %307
    %v310 = vmul.f32 %v292, %v308
    %vm311 = vcmp.gt.f32.partialorder %v51, 3.0
    %v312 = vsel %vm311, 1, 0
    %v313 = vcvt.s32.f32 %v312
    %315 = vset.pattern.permute.xlu0 0
    %316 = vperm.xlu0 %315, %v313
    %v317 = vpop.permute.xlu0 %316
    %v319 = vmul.f32 %v317, %v310
    %s320 = scalar_lea.vmem [#allocation2], 32
    %v321 = vld [vmem:[%s320] sm:$0xff]
    %323 = vrot.lane.b32.xlu0 %v310, 64
    %v324 = vpop.permute.xlu0 %323
    %v325 = vsel %vm98, %v324, 0
    %327 = vmatpush.msra.mxu0 0.0
    %328 = vmatpush.msra.mxu0 0.0
    %329 = vmatpush.msra.mxu0 0.0
    %330 = vmatpush.msra.mxu0 0.0
    %331 = vmatpush.msra.mxu0 0.0
    %332 = vmatpush.msra.mxu0 0.0
    %333 = vmatpush.msra.mxu0 0.0
    %334 = vmatpush.msra.mxu0 0.0
    %335 = vmatpush.msra.mxu0 0.0
    %336 = vmatpush.msra.mxu0 0.0
    %337 = vmatpush.msra.mxu0 0.0
    %338 = vmatpush.msra.mxu0 0.0
    %339 = vmatpush.msra.mxu0 %v50
    %340 = vmatpush.msra.mxu0 %v49
    %341 = vmatpush.msra.mxu0 %v48
    %342 = vmatpush.msra.mxu0 %v47
    %343 = vmatmul.f32.gmra.mxu0 %v325
    %v344 = vpop.f32.mrf.mxu0
    %v345 = vadd.f32 0.0, %v344
    %346 = vdwg.mxu0
    %v347 = vadd.f32 %v321, %v345
    %v348 = vxor.u32 %v347, 2147483648
    %v349 = vmul.f32 %v348, 1.442695
    %v350 = vpow.pop %v349
    %v351 = vadd.f32 %v350, 1.0
    %v352 = vrcp.pop %v351
    %v353 = vmul.f32 %v351, %v352
    %v354 = vsub.f32 1.0, %v353
    %v355 = vmul.f32 %v352, %v354
    %v356 = vadd.f32 %v352, %v355
    %vm357 = vweird.f32 %v351
    %vm358 = vweird.f32 %v352
    %vm359 = vmor %vm357, %vm358
    %v360 = vsel %vm359, %v352, %v356
    %v361 = vand.u32 2147483647, %v351
    %vm362 = vcmp.eq.f32.partialorder %v361, 8.507059e+37
    %v363 = vand.u32 %v351, 2147483648
    %v364 = vor.u32 1.1754944e-38, %v363
    %v365 = vsel %vm362, %v364, %v360
    %v366 = vmul.f32 1.0, %v365
    %v367 = vtanh.pop %v347
    %v368 = vmul.f32 %v366, %v304
    %370 = vrot.lane.b32.xlu0 %v367, 32
    %v371 = vpop.permute.xlu0 %370
    %v373 = vmul.f32 %v366, %v371
    %375 = vrot.lane.b32.xlu0 %v373, 32
    %v376 = vpop.permute.xlu0 %375
    %v378 = vadd.f32 %v368, %v376
    %v379 = vtanh.pop %v378
    %381 = vrot.lane.b32.xlu0 %v379, 32
    %v382 = vpop.permute.xlu0 %381
    %v384 = vmul.f32 %v366, %v382
    %vm385 = vcmp.gt.f32.partialorder %v51, 4.0
    %v386 = vsel %vm385, 1, 0
    %v387 = vcvt.s32.f32 %v386
    %389 = vset.pattern.permute.xlu0 0
    %390 = vperm.xlu0 %389, %v387
    %v391 = vpop.permute.xlu0 %390
    %v393 = vmul.f32 %v391, %v384
    %s394 = scalar_lea.vmem [#allocation2], 40
    %v395 = vld [vmem:[%s394] sm:$0xff]
    %397 = vrot.lane.b32.xlu0 %v384, 64
    %v398 = vpop.permute.xlu0 %397
    %v399 = vsel %vm98, %v398, 0
    %401 = vmatpush.msra.mxu0 0.0
    %402 = vmatpush.msra.mxu0 0.0
    %403 = vmatpush.msra.mxu0 0.0
    %404 = vmatpush.msra.mxu0 0.0
    %405 = vmatpush.msra.mxu0 0.0
    %406 = vmatpush.msra.mxu0 0.0
    %407 = vmatpush.msra.mxu0 0.0
    %408 = vmatpush.msra.mxu0 0.0
    %409 = vmatpush.msra.mxu0 0.0
    %410 = vmatpush.msra.mxu0 0.0
    %411 = vmatpush.msra.mxu0 0.0
    %412 = vmatpush.msra.mxu0 0.0
    %413 = vmatpush.msra.mxu0 %v50
    %414 = vmatpush.msra.mxu0 %v49
    %415 = vmatpush.msra.mxu0 %v48
    %416 = vmatpush.msra.mxu0 %v47
    %417 = vmatmul.f32.gmra.mxu0 %v399
    %v418 = vpop.f32.mrf.mxu0
    %v419 = vadd.f32 0.0, %v418
    %420 = vdwg.mxu0
    %v421 = vadd.f32 %v395, %v419
    %v422 = vxor.u32 %v421, 2147483648
    %v423 = vmul.f32 %v422, 1.442695
    %v424 = vpow.pop %v423
    %v425 = vadd.f32 %v424, 1.0
    %v426 = vrcp.pop %v425
    %v427 = vmul.f32 %v425, %v426
    %v428 = vsub.f32 1.0, %v427
    %v429 = vmul.f32 %v426, %v428
    %v430 = vadd.f32 %v426, %v429
    %vm431 = vweird.f32 %v425
    %vm432 = vweird.f32 %v426
    %vm433 = vmor %vm431, %vm432
    %v434 = vsel %vm433, %v426, %v430
    %v435 = vand.u32 2147483647, %v425
    %vm436 = vcmp.eq.f32.partialorder %v435, 8.507059e+37
    %v437 = vand.u32 %v425, 2147483648
    %v438 = vor.u32 1.1754944e-38, %v437
    %v439 = vsel %vm436, %v438, %v434
    %v440 = vmul.f32 1.0, %v439
    %v441 = vtanh.pop %v421
    %v442 = vmul.f32 %v440, %v378
    %444 = vrot.lane.b32.xlu0 %v441, 32
    %v445 = vpop.permute.xlu0 %444
    %v447 = vmul.f32 %v440, %v445
    %449 = vrot.lane.b32.xlu0 %v447, 32
    %v450 = vpop.permute.xlu0 %449
    %v452 = vadd.f32 %v442, %v450
    %v453 = vtanh.pop %v452
    %455 = vrot.lane.b32.xlu0 %v453, 32
    %v456 = vpop.permute.xlu0 %455
    %v458 = vmul.f32 %v440, %v456
    %vm459 = vcmp.gt.f32.partialorder %v51, 5.0
    %v460 = vsel %vm459, 1, 0
    %v461 = vcvt.s32.f32 %v460
    %463 = vset.pattern.permute.xlu0 0
    %464 = vperm.xlu0 %463, %v461
    %v465 = vpop.permute.xlu0 %464
    %v467 = vmul.f32 %v465, %v458
    %s468 = scalar_lea.vmem [#allocation2], 48
    %v469 = vld [vmem:[%s468] sm:$0xff]
    %471 = vrot.lane.b32.xlu0 %v458, 64
    %v472 = vpop.permute.xlu0 %471
    %v473 = vsel %vm98, %v472, 0
    %475 = vmatpush.msra.mxu0 0.0
    %476 = vmatpush.msra.mxu0 0.0
    %477 = vmatpush.msra.mxu0 0.0
    %478 = vmatpush.msra.mxu0 0.0
    %479 = vmatpush.msra.mxu0 0.0
    %480 = vmatpush.msra.mxu0 0.0
    %481 = vmatpush.msra.mxu0 0.0
    %482 = vmatpush.msra.mxu0 0.0
    %483 = vmatpush.msra.mxu0 0.0
    %484 = vmatpush.msra.mxu0 0.0
    %485 = vmatpush.msra.mxu0 0.0
    %486 = vmatpush.msra.mxu0 0.0
    %487 = vmatpush.msra.mxu0 %v50
    %488 = vmatpush.msra.mxu0 %v49
    %489 = vmatpush.msra.mxu0 %v48
    %490 = vmatpush.msra.mxu0 %v47
    %491 = vmatmul.f32.gmra.mxu0 %v473
    %v492 = vpop.f32.mrf.mxu0
    %v493 = vadd.f32 0.0, %v492
    %494 = vdwg.mxu0
    %v495 = vadd.f32 %v469, %v493
    %v496 = vxor.u32 %v495, 2147483648
    %v497 = vmul.f32 %v496, 1.442695
    %v498 = vpow.pop %v497
    %v499 = vadd.f32 %v498, 1.0
    %v500 = vrcp.pop %v499
    %v501 = vmul.f32 %v499, %v500
    %v502 = vsub.f32 1.0, %v501
    %v503 = vmul.f32 %v500, %v502
    %v504 = vadd.f32 %v500, %v503
    %vm505 = vweird.f32 %v499
    %vm506 = vweird.f32 %v500
    %vm507 = vmor %vm505, %vm506
    %v508 = vsel %vm507, %v500, %v504
    %v509 = vand.u32 2147483647, %v499
    %vm510 = vcmp.eq.f32.partialorder %v509, 8.507059e+37
    %v511 = vand.u32 %v499, 2147483648
    %v512 = vor.u32 1.1754944e-38, %v511
    %v513 = vsel %vm510, %v512, %v508
    %v514 = vmul.f32 1.0, %v513
    %v515 = vtanh.pop %v495
    %v516 = vmul.f32 %v514, %v452
    %518 = vrot.lane.b32.xlu0 %v515, 32
    %v519 = vpop.permute.xlu0 %518
    %v521 = vmul.f32 %v514, %v519
    %523 = vrot.lane.b32.xlu0 %v521, 32
    %v524 = vpop.permute.xlu0 %523
    %v526 = vadd.f32 %v516, %v524
    %v527 = vtanh.pop %v526
    %529 = vrot.lane.b32.xlu0 %v527, 32
    %v530 = vpop.permute.xlu0 %529
    %v532 = vmul.f32 %v514, %v530
    %vm533 = vcmp.gt.f32.partialorder %v51, 6.0
    %v534 = vsel %vm533, 1, 0
    %v535 = vcvt.s32.f32 %v534
    %537 = vset.pattern.permute.xlu0 0
    %538 = vperm.xlu0 %537, %v535
    %v539 = vpop.permute.xlu0 %538
    %v541 = vmul.f32 %v539, %v532
    %s542 = scalar_lea.vmem [#allocation2], 56
    %v543 = vld [vmem:[%s542] sm:$0xff]
    %545 = vrot.lane.b32.xlu0 %v532, 64
    %v546 = vpop.permute.xlu0 %545
    %v547 = vsel %vm98, %v546, 0
    %549 = vmatpush.msra.mxu0 0.0
    %550 = vmatpush.msra.mxu0 0.0
    %551 = vmatpush.msra.mxu0 0.0
    %552 = vmatpush.msra.mxu0 0.0
    %553 = vmatpush.msra.mxu0 0.0
    %554 = vmatpush.msra.mxu0 0.0
    %555 = vmatpush.msra.mxu0 0.0
    %556 = vmatpush.msra.mxu0 0.0
    %557 = vmatpush.msra.mxu0 0.0
    %558 = vmatpush.msra.mxu0 0.0
    %559 = vmatpush.msra.mxu0 0.0
    %560 = vmatpush.msra.mxu0 0.0
    %561 = vmatpush.msra.mxu0 %v50
    %562 = vmatpush.msra.mxu0 %v49
    %563 = vmatpush.msra.mxu0 %v48
    %564 = vmatpush.msra.mxu0 %v47
    %565 = vmatmul.f32.gmra.mxu0 %v547
    %v566 = vpop.f32.mrf.mxu0
    %v567 = vadd.f32 0.0, %v566
    %568 = vdwg.mxu0
    %v569 = vadd.f32 %v543, %v567
    %v570 = vxor.u32 %v569, 2147483648
    %v571 = vmul.f32 %v570, 1.442695
    %v572 = vpow.pop %v571
    %v573 = vadd.f32 %v572, 1.0
    %v574 = vrcp.pop %v573
    %v575 = vmul.f32 %v573, %v574
    %v576 = vsub.f32 1.0, %v575
    %v577 = vmul.f32 %v574, %v576
    %v578 = vadd.f32 %v574, %v577
    %vm579 = vweird.f32 %v573
    %vm580 = vweird.f32 %v574
    %vm581 = vmor %vm579, %vm580
    %v582 = vsel %vm581, %v574, %v578
    %v583 = vand.u32 2147483647, %v573
    %vm584 = vcmp.eq.f32.partialorder %v583, 8.507059e+37
    %v585 = vand.u32 %v573, 2147483648
    %v586 = vor.u32 1.1754944e-38, %v585
    %v587 = vsel %vm584, %v586, %v582
    %v588 = vmul.f32 1.0, %v587
    %v589 = vtanh.pop %v569
    %v590 = vmul.f32 %v588, %v526
    %592 = vrot.lane.b32.xlu0 %v589, 32
    %v593 = vpop.permute.xlu0 %592
    %v595 = vmul.f32 %v588, %v593
    %597 = vrot.lane.b32.xlu0 %v595, 32
    %v598 = vpop.permute.xlu0 %597
    %v600 = vadd.f32 %v590, %v598
    %v601 = vtanh.pop %v600
    %603 = vrot.lane.b32.xlu0 %v601, 32
    %v604 = vpop.permute.xlu0 %603
    %v606 = vmul.f32 %v588, %v604
    %vm607 = vcmp.gt.f32.partialorder %v51, 7.0
    %v608 = vsel %vm607, 1, 0
    %v609 = vcvt.s32.f32 %v608
    %611 = vset.pattern.permute.xlu0 0
    %612 = vperm.xlu0 %611, %v609
    %v613 = vpop.permute.xlu0 %612
    %v615 = vmul.f32 %v613, %v606
    %617 = vrot.lane.b32.xlu0 %v92, 64
    %v618 = vpop.permute.xlu0 %617
    %621 = vrot.lane.b32.xlu0 %v171, 96
    %v622 = vpop.permute.xlu0 %621
    %625 = vrot.lane.b32.xlu0 %v319, 32
    %v626 = vpop.permute.xlu0 %625
    %629 = vrot.lane.b32.xlu0 %v393, 64
    %v630 = vpop.permute.xlu0 %629
    %633 = vrot.lane.b32.xlu0 %v467, 96
    %v634 = vpop.permute.xlu0 %633
    %637 = vrot.lane.b32.xlu0 %v615, 32
    %v638 = vpop.permute.xlu0 %637
    %v640 = vsel %vm98, %v618, %v622
    %vm641 = vcmask 523264
    %v642 = vsel %vm641, %v640, %v245
    %vm643 = vcmask 785408
    %v644 = vsel %vm643, %v642, %v626
    %v645 = vsel %vm98, %v630, %v634
    %v646 = vsel %vm641, %v645, %v541
    %v647 = vsel %vm643, %v646, %v638
    %648 = vst [vmem:[#allocation7] sm:$0xff] %v644
    %649 = vst [vmem:[#allocation7 + $0x8] sm:$0xff] %v647
    // Predicated region
    $region22: #{tpu_custom_call.1} parent=1 // pred_check
      _
    $region23: #{tpu_custom_call.1} parent=1 // pred_check_branch
      %651 = sbr.rel (0) target = $region25
    $region24: #{tpu_custom_call.1} parent=1 // pred_region
      %653 = vsyncadd [#allocation4], 0
      %s655 = sshll.u32 [#allocation7], 4
      %s656 = int_to_ptr.vmem [resolvable:$true] %s655
      %s657 = sshll.u32 %s3, 4
      %s658 = int_to_ptr.hbm [resolvable:$true] %s657
      %660 = dma.vmem_to_hbm [thread:$0]  %s656, 256, %s658, [#allocation4]
    $region25: #{tpu_custom_call.1} parent=1 // pred_fallthru
      _
    // Predicated region
    $region26: #{tpu_custom_call.1} parent=1 // pred_check
      _
    $region27: #{tpu_custom_call.1} parent=1 // pred_check_branch
      %662 = sbr.rel (0) target = $region29
    $region28: #{tpu_custom_call.1} parent=1 // pred_region
      %664 = dma.done [#allocation4], 256
    $region29: #{tpu_custom_call.1} parent=1 // pred_fallthru
      _
    %665 = vsyncpa [#allocation3], 1
    %666 = vsyncpa [#allocation6], 1
    %667 = vsyncpa [#allocation4], 1

</llo_original>
